<compile_context>
chip_gen: v7x
topology: tpu7x:2x2x1
jax: 0.10.0
libtpu: 0.0.40
codegen_flags: <defaults>
</compile_context>

<pallas_src>
import jax
import jax.numpy as jnp
from jax import lax
from jax.experimental import pallas as pl
from jax.experimental.pallas import tpu as pltpu

NUM_CLASSES = 5
PADDED_CLASSES = 128          # lane-aligned class dimension
IGNORE_INDEX = -100           # PyTorch CrossEntropyLoss default


def _tokenizer_ce_kernel(x_ref, w_ref, b_ref, lbl_ref, loss_ref, cnt_ref):
    """Fused Linear + CrossEntropy(sum) tile kernel.

    x_ref   : (T, H)    activations (f32 or bf16)
    w_ref   : (H, 128)  Linear weight, transposed, zero-padded cols >= 5
    b_ref   : (1, 128)  Linear bias (f32), zero-padded cols >= 5
    lbl_ref : (T, 1)    int32 labels (-100 / out-of-range => ignored)
    loss_ref: (1, 1, 1) f32 per-split running sum of per-row CE
    cnt_ref : (1, 1, 1) f32 per-split running count of valid rows
    """
    # Init the per-split accumulators on the first inner (reduction) step.
    @pl.when(pl.program_id(1) == 0)
    def _():
        loss_ref[...] = jnp.zeros_like(loss_ref)
        cnt_ref[...] = jnp.zeros_like(cnt_ref)

    # --- Linear layer (MXU, f32 accumulation) ---
    logits = jnp.dot(x_ref[...], w_ref[...],
                     preferred_element_type=jnp.float32) + b_ref[...]

    # --- Cross entropy over the 5 valid lanes (VPU/XLU, f32) ---
    col = lax.broadcasted_iota(jnp.int32, logits.shape, 1)
    lane_valid = col < NUM_CLASSES
    masked = jnp.where(lane_valid, logits, jnp.float32(-1e30))

    m = jnp.max(masked, axis=-1, keepdims=True)                  # (T, 1)
    # masked lanes are -1e30 so exp underflows to 0; no extra select needed.
    sum_exp = jnp.sum(jnp.exp(masked - m), axis=-1, keepdims=True)
    lse = m + jnp.log(sum_exp)                                   # (T, 1)

    labels = lbl_ref[...]                                        # (T, 1) int32
    picked = jnp.sum(jnp.where(col == labels, logits, 0.0),
                     axis=-1, keepdims=True)                     # (T, 1)

    row_valid = jnp.logical_and(labels >= 0, labels < NUM_CLASSES)
    per_row = jnp.where(row_valid, lse - picked, 0.0)            # (T, 1)

    loss_ref[...] += jnp.sum(per_row)
    cnt_ref[...] += jnp.sum(row_valid.astype(jnp.float32))


def _round_up(x, m):
    return (x + m - 1) // m * m


def _pick_tile_rows(rows_per_split, hidden, itemsize):
    """Largest row tile whose double-buffered activation slab stays ~6 MiB."""
    sublane = 8 * (4 // itemsize)           # 8 for f32, 16 for bf16
    budget = 6 * 1024 * 1024                # 2 pipelined x buffers
    cap = (budget // (2 * hidden * itemsize)) // sublane * sublane
    cap = max(sublane, min(cap, 2048))
    return min(cap, _round_up(rows_per_split, sublane))


def tokenizer_classifier_forward(wordpiece_reprs, token_type_idxs, weight, bias,
                                 *, num_splits=2):
    """wordpiece_reprs: (B, S, H) f32/bf16; token_type_idxs: (B, S) int;
       weight: (5, H) f32 (PyTorch nn.Linear layout); bias: (5,) f32."""
    B, S, H = wordpiece_reprs.shape
    N = B * S

    x = wordpiece_reprs.reshape(N, H)                 # keep incoming dtype
    labels = token_type_idxs.reshape(N, 1).astype(jnp.int32)

    itemsize = jnp.dtype(x.dtype).itemsize
    rows_per_split = pl.cdiv(N, num_splits)
    tile_rows = _pick_tile_rows(rows_per_split, H, itemsize)
    tiles_per_split = pl.cdiv(rows_per_split, tile_rows)
    padded_n = num_splits * tiles_per_split * tile_rows

    if padded_n > N:
        # Pad rows with zeros and IGNORE labels so they never contribute.
        x = jnp.pad(x, ((0, padded_n - N), (0, 0)))
        labels = jnp.pad(labels, ((0, padded_n - N), (0, 0)),
                         constant_values=IGNORE_INDEX)

    # Transpose + lane-pad the Linear parameters (glue, plain JAX).
    w_t = jnp.zeros((H, PADDED_CLASSES), x.dtype).at[:, :NUM_CLASSES].set(
        weight.T.astype(x.dtype))
    b_p = jnp.zeros((1, PADDED_CLASSES), jnp.float32).at[:, :NUM_CLASSES].set(
        bias.astype(jnp.float32))

    cost = pl.CostEstimate(
        flops=2 * padded_n * H * PADDED_CLASSES,
        transcendentals=padded_n * (PADDED_CLASSES + 1),
        bytes_accessed=(padded_n * H * itemsize
                        + H * PADDED_CLASSES * itemsize
                        + padded_n * 4
                        + num_splits * 8),
    )

    loss_parts, cnt_parts = pl.pallas_call(
        _tokenizer_ce_kernel,
        out_shape=(jax.ShapeDtypeStruct((num_splits, 1, 1), jnp.float32),
                   jax.ShapeDtypeStruct((num_splits, 1, 1), jnp.float32)),
        grid_spec=pltpu.PrefetchScalarGridSpec(
            num_scalar_prefetch=0,
            grid=(num_splits, tiles_per_split),
            in_specs=[
                pl.BlockSpec((tile_rows, H),
                             lambda c, i: (c * tiles_per_split + i, 0)),
                pl.BlockSpec((H, PADDED_CLASSES), lambda c, i: (0, 0)),
                pl.BlockSpec((1, PADDED_CLASSES), lambda c, i: (0, 0)),
                # TODO(synk): labels as (T,1) int32 pad to 128 lanes in VMEM;
                # lane-dense packing would shave ~0.5-1 MiB on VMEM-tight v7x.
                pl.BlockSpec((tile_rows, 1),
                             lambda c, i: (c * tiles_per_split + i, 0)),
            ],
            out_specs=[
                pl.BlockSpec((1, 1, 1), lambda c, i: (c, 0, 0)),
                pl.BlockSpec((1, 1, 1), lambda c, i: (c, 0, 0)),
            ],
        ),
        compiler_params=pltpu.CompilerParams(
            dimension_semantics=("parallel", "arbitrary")),
        cost_estimate=cost,
    )(x, w_t, b_p, labels)

    # Mean over non-ignored targets (matches torch CrossEntropyLoss default).
    return jnp.sum(loss_parts) / jnp.sum(cnt_parts)


def _reference_loss(x2d, labels1d, weight, bias):
    """Pure-JAX reference: Linear -> CrossEntropy(mean, ignore_index<0)."""
    logits = jnp.dot(x2d, weight.T.astype(x2d.dtype),
                     preferred_element_type=jnp.float32) + bias.astype(jnp.float32)
    valid = jnp.logical_and(labels1d >= 0, labels1d < NUM_CLASSES)
    lse = jax.scipy.special.logsumexp(logits, axis=-1)
    safe = jnp.clip(labels1d, 0, NUM_CLASSES - 1)
    picked = jnp.take_along_axis(logits, safe[:, None], axis=-1)[:, 0]
    per = jnp.where(valid, lse - picked, 0.0)
    return jnp.sum(per) / jnp.sum(valid.astype(jnp.float32))


if __name__ == "__main__":
    # Config implies xlmr_dim = 768 (xlm-roberta-base); keep batch/seq small.
    H = 768
    key = jax.random.PRNGKey(0)
    k_x, k_w, k_b, k_y = jax.random.split(key, 4)

    # Deterministic synthetic Linear(768, 5) parameters (not a checkpoint).
    weight = jax.random.normal(k_w, (NUM_CLASSES, H), dtype=jnp.float32) * 0.02
    bias = jax.random.normal(k_b, (NUM_CLASSES,), dtype=jnp.float32) * 0.02

    # --- Test 1: f32 activations, all labels valid ------------------------
    B, S = 2, 8
    x1 = jax.random.normal(k_x, (B, S, H), dtype=jnp.float32)
    y1 = jax.random.randint(k_y, (B, S), 0, NUM_CLASSES, dtype=jnp.int32)
    loss1 = tokenizer_classifier_forward(x1, y1, weight, bias)
    jax.block_until_ready(loss1)
    ref1 = _reference_loss(x1.reshape(-1, H), y1.reshape(-1), weight, bias)
    assert jnp.allclose(loss1, ref1, rtol=1e-5, atol=1e-5), (loss1, ref1)

    # --- Test 2: odd row count (last-tile padding) + ignored labels -------
    B2, S2 = 3, 5
    x2 = jax.random.normal(jax.random.PRNGKey(1), (B2, S2, H), dtype=jnp.float32)
    y2 = jax.random.randint(jax.random.PRNGKey(2), (B2, S2), 0, NUM_CLASSES,
                            dtype=jnp.int32)
    y2 = y2.at[0, 0].set(IGNORE_INDEX).at[2, 4].set(IGNORE_INDEX)
    loss2 = tokenizer_classifier_forward(x2, y2, weight, bias)
    jax.block_until_ready(loss2)
    ref2 = _reference_loss(x2.reshape(-1, H), y2.reshape(-1), weight, bias)
    assert jnp.allclose(loss2, ref2, rtol=1e-5, atol=1e-5), (loss2, ref2)

    # --- Test 3: bf16 activations (halved HBM traffic path) ---------------
    x3 = x1.astype(jnp.bfloat16)
    loss3 = tokenizer_classifier_forward(x3, y1, weight, bias)
    jax.block_until_ready(loss3)
    ref3 = _reference_loss(x3.reshape(-1, H), y1.reshape(-1), weight, bias)
    assert jnp.allclose(loss3, ref3, rtol=2e-2, atol=2e-2), (loss3, ref3)

    print("KERNEL_OK")
</pallas_src>

<mosaic_0001>
module attributes {stable_mosaic.version = 11 : i64} {
  func.func @_tokenizer_ce_kernel(%arg0: i32, %arg1: i32, %arg2: memref<8x768xf32, #tpu.memory_space<vmem>>, %arg3: memref<768x128xf32, #tpu.memory_space<vmem>>, %arg4: memref<1x128xf32, #tpu.memory_space<vmem>>, %arg5: memref<8x1xi32, #tpu.memory_space<vmem>>, %arg6: memref<1x1x1xf32, #tpu.memory_space<vmem>>, %arg7: memref<1x1x1xf32, #tpu.memory_space<vmem>>) attributes {dimension_semantics = [#tpu.dimension_semantics<parallel>, #tpu.dimension_semantics<arbitrary>], iteration_bounds = array<i64: 2, 1>, scalar_prefetch = 0 : i64, scratch_operands = 0 : i64, tpu.core_type = #tpu.core_type<tc>, window_params = [{transform_indices = @transform_0, window_bounds = array<i64: 8, 768>}, {pipeline_mode = #tpu.pipeline_mode<synchronous>, transform_indices = @transform_1, window_bounds = array<i64: 768, 128>}, {pipeline_mode = #tpu.pipeline_mode<synchronous>, transform_indices = @transform_2, window_bounds = array<i64: 1, 128>}, {transform_indices = @transform_3, window_bounds = array<i64: 8, 1>}, {transform_indices = @transform_4, window_bounds = array<i64: 1, 1, 1>}, {transform_indices = @transform_5, window_bounds = array<i64: 1, 1, 1>}]} {
    %c0_i32 = arith.constant 0 : i32
    %0 = arith.cmpi eq, %arg1, %c0_i32 : i32
    %1 = arith.extui %0 : i1 to i32
    %c0_i32_0 = arith.constant 0 : i32
    %2 = arith.cmpi ne, %1, %c0_i32_0 : i32
    scf.if %2 {
      %cst_30 = arith.constant 0.000000e+00 : f32
      %56 = vector.broadcast %cst_30 : f32 to vector<1x1x1xf32>
      %c0_31 = arith.constant 0 : index
      %c0_32 = arith.constant 0 : index
      %c0_33 = arith.constant 0 : index
      %57 = vector.load %arg6[%c0_31, %c0_32, %c0_33] : memref<1x1x1xf32, #tpu.memory_space<vmem>>, vector<1x1x1xf32>
      tpu.vector_store %arg6[%c0_31, %c0_32, %c0_33], %56 {strides = array<i32>} : memref<1x1x1xf32, #tpu.memory_space<vmem>>, vector<1x1x1xf32>,
      %cst_34 = arith.constant 0.000000e+00 : f32
      %58 = vector.broadcast %cst_34 : f32 to vector<1x1x1xf32>
      %c0_35 = arith.constant 0 : index
      %c0_36 = arith.constant 0 : index
      %c0_37 = arith.constant 0 : index
      %59 = vector.load %arg7[%c0_35, %c0_36, %c0_37] : memref<1x1x1xf32, #tpu.memory_space<vmem>>, vector<1x1x1xf32>
      tpu.vector_store %arg7[%c0_35, %c0_36, %c0_37], %58 {strides = array<i32>} : memref<1x1x1xf32, #tpu.memory_space<vmem>>, vector<1x1x1xf32>,
    } else {
    }
    %c0 = arith.constant 0 : index
    %c0_1 = arith.constant 0 : index
    %3 = vector.load %arg2[%c0, %c0_1] : memref<8x768xf32, #tpu.memory_space<vmem>>, vector<8x768xf32>
    %c0_2 = arith.constant 0 : index
    %c0_3 = arith.constant 0 : index
    %4 = vector.load %arg3[%c0_2, %c0_3] : memref<768x128xf32, #tpu.memory_space<vmem>>, vector<768x128xf32>
    %cst = arith.constant dense<0.000000e+00> : vector<8x128xf32>
    %5 = tpu.matmul %3, %4, %cst {dimension_numbers = #tpu.dot_dimension_numbers<[1], [0], [0], [1], [0, 0, 1, 1], [], []>} : vector<8x768xf32>, vector<768x128xf32>, vector<8x128xf32> -> vector<8x128xf32>
    %c0_4 = arith.constant 0 : index
    %c0_5 = arith.constant 0 : index
    %6 = vector.load %arg4[%c0_4, %c0_5] : memref<1x128xf32, #tpu.memory_space<vmem>>, vector<1x128xf32>
    %7 = vector.broadcast %6 : vector<1x128xf32> to vector<8x128xf32>
    %8 = arith.addf %5, %7 : vector<8x128xf32>
    %9 = tpu.iota {dimensions = array<i32: 1>} : vector<8x128xi32>
    %c5_i32 = arith.constant 5 : i32
    %10 = vector.broadcast %c5_i32 : i32 to vector<8x128xi32>
    %11 = arith.cmpi slt, %9, %10 : vector<8x128xi32>
    %cst_6 = arith.constant -1.000000e+30 : f32
    %12 = vector.broadcast %cst_6 : f32 to vector<8x128xf32>
    %13 = arith.select %11, %8, %12 : vector<8x128xi1>, vector<8x128xf32>
    %cst_7 = arith.constant dense<0xFF800000> : vector<8xf32>
    %14 = vector.multi_reduction <maximumf>, %13, %cst_7 [1] : vector<8x128xf32> to vector<8xf32>
    %15 = vector.shape_cast %14 : vector<8xf32> to vector<8x1xf32>
    %16 = vector.broadcast %15 : vector<8x1xf32> to vector<8x128xf32>
    %17 = arith.subf %13, %16 : vector<8x128xf32>
    %18 = math.exp %17 : vector<8x128xf32>
    %cst_8 = arith.constant dense<0.000000e+00> : vector<8xf32>
    %19 = vector.multi_reduction <add>, %18, %cst_8 [1] : vector<8x128xf32> to vector<8xf32>
    %20 = vector.shape_cast %19 : vector<8xf32> to vector<8x1xf32>
    %21 = math.log %20 : vector<8x1xf32>
    %22 = arith.addf %15, %21 : vector<8x1xf32>
    %c0_9 = arith.constant 0 : index
    %c0_10 = arith.constant 0 : index
    %23 = vector.load %arg5[%c0_9, %c0_10] : memref<8x1xi32, #tpu.memory_space<vmem>>, vector<8x1xi32>
    %24 = vector.broadcast %23 : vector<8x1xi32> to vector<8x128xi32>
    %25 = arith.cmpi eq, %9, %24 : vector<8x128xi32>
    %cst_11 = arith.constant 0.000000e+00 : f32
    %26 = vector.broadcast %cst_11 : f32 to vector<8x128xf32>
    %27 = arith.select %25, %8, %26 : vector<8x128xi1>, vector<8x128xf32>
    %cst_12 = arith.constant dense<0.000000e+00> : vector<8xf32>
    %28 = vector.multi_reduction <add>, %27, %cst_12 [1] : vector<8x128xf32> to vector<8xf32>
    %29 = vector.shape_cast %28 : vector<8xf32> to vector<8x1xf32>
    %c0_i32_13 = arith.constant 0 : i32
    %30 = vector.broadcast %c0_i32_13 : i32 to vector<8x1xi32>
    %31 = arith.cmpi sge, %23, %30 : vector<8x1xi32>
    %c5_i32_14 = arith.constant 5 : i32
    %32 = vector.broadcast %c5_i32_14 : i32 to vector<8x1xi32>
    %33 = arith.cmpi slt, %23, %32 : vector<8x1xi32>
    %34 = arith.andi %31, %33 : vector<8x1xi1>
    %35 = arith.subf %22, %29 : vector<8x1xf32>
    %cst_15 = arith.constant 0.000000e+00 : f32
    %36 = vector.broadcast %cst_15 : f32 to vector<8x1xf32>
    %37 = arith.select %34, %35, %36 : vector<8x1xi1>, vector<8x1xf32>
    %c0_16 = arith.constant 0 : index
    %c0_17 = arith.constant 0 : index
    %c0_18 = arith.constant 0 : index
    %38 = vector.load %arg6[%c0_16, %c0_17, %c0_18] : memref<1x1x1xf32, #tpu.memory_space<vmem>>, vector<1x1x1xf32>
    %39 = vector.shape_cast %37 : vector<8x1xf32> to vector<1x8x1xf32>
    %cst_19 = arith.constant dense<0.000000e+00> : vector<1xf32>
    %40 = vector.multi_reduction <add>, %39, %cst_19 [1, 2] : vector<1x8x1xf32> to vector<1xf32>
    %41 = vector.shape_cast %40 : vector<1xf32> to vector<1x1x1xf32>
    %42 = vector.extract %41[0, 0, 0] : f32 from vector<1x1x1xf32>
    %43 = vector.broadcast %42 : f32 to vector<1x1x1xf32>
    %44 = arith.addf %38, %43 : vector<1x1x1xf32>
    %c0_20 = arith.constant 0 : index
    %c0_21 = arith.constant 0 : index
    %c0_22 = arith.constant 0 : index
    %45 = vector.load %arg6[%c0_20, %c0_21, %c0_22] : memref<1x1x1xf32, #tpu.memory_space<vmem>>, vector<1x1x1xf32>
    tpu.vector_store %arg6[%c0_20, %c0_21, %c0_22], %44 {strides = array<i32>} : memref<1x1x1xf32, #tpu.memory_space<vmem>>, vector<1x1x1xf32>,
    %c0_23 = arith.constant 0 : index
    %c0_24 = arith.constant 0 : index
    %c0_25 = arith.constant 0 : index
    %46 = vector.load %arg7[%c0_23, %c0_24, %c0_25] : memref<1x1x1xf32, #tpu.memory_space<vmem>>, vector<1x1x1xf32>
    %47 = arith.extui %34 : vector<8x1xi1> to vector<8x1xi32>
    %48 = arith.sitofp %47 : vector<8x1xi32> to vector<8x1xf32>
    %49 = vector.shape_cast %48 : vector<8x1xf32> to vector<1x8x1xf32>
    %cst_26 = arith.constant dense<0.000000e+00> : vector<1xf32>
    %50 = vector.multi_reduction <add>, %49, %cst_26 [1, 2] : vector<1x8x1xf32> to vector<1xf32>
    %51 = vector.shape_cast %50 : vector<1xf32> to vector<1x1x1xf32>
    %52 = vector.extract %51[0, 0, 0] : f32 from vector<1x1x1xf32>
    %53 = vector.broadcast %52 : f32 to vector<1x1x1xf32>
    %54 = arith.addf %46, %53 : vector<1x1x1xf32>
    %c0_27 = arith.constant 0 : index
    %c0_28 = arith.constant 0 : index
    %c0_29 = arith.constant 0 : index
    %55 = vector.load %arg7[%c0_27, %c0_28, %c0_29] : memref<1x1x1xf32, #tpu.memory_space<vmem>>, vector<1x1x1xf32>
    tpu.vector_store %arg7[%c0_27, %c0_28, %c0_29], %54 {strides = array<i32>} : memref<1x1x1xf32, #tpu.memory_space<vmem>>, vector<1x1x1xf32>,
    return
  }
  func.func @transform_0(%arg0: i32, %arg1: i32) -> (i32, i32) {
    %c1_i32 = arith.constant 1 : i32
    %0 = arith.muli %arg0, %c1_i32 : i32
    %1 = arith.addi %0, %arg1 : i32
    %c0_i32 = arith.constant 0 : i32
    %c0_i32_0 = arith.constant 0 : i32
    return %1, %c0_i32 : i32, i32
  }
  func.func @transform_1(%arg0: i32, %arg1: i32) -> (i32, i32) {
    %c0_i32 = arith.constant 0 : i32
    %c0_i32_0 = arith.constant 0 : i32
    %c0_i32_1 = arith.constant 0 : i32
    return %c0_i32, %c0_i32_0 : i32, i32
  }
  func.func @transform_2(%arg0: i32, %arg1: i32) -> (i32, i32) {
    %c0_i32 = arith.constant 0 : i32
    %c0_i32_0 = arith.constant 0 : i32
    %c0_i32_1 = arith.constant 0 : i32
    return %c0_i32, %c0_i32_0 : i32, i32
  }
  func.func @transform_3(%arg0: i32, %arg1: i32) -> (i32, i32) {
    %c1_i32 = arith.constant 1 : i32
    %0 = arith.muli %arg0, %c1_i32 : i32
    %1 = arith.addi %0, %arg1 : i32
    %c0_i32 = arith.constant 0 : i32
    %c0_i32_0 = arith.constant 0 : i32
    return %1, %c0_i32 : i32, i32
  }
  func.func @transform_4(%arg0: i32, %arg1: i32) -> (i32, i32, i32) {
    %c0_i32 = arith.constant 0 : i32
    %c0_i32_0 = arith.constant 0 : i32
    %c0_i32_1 = arith.constant 0 : i32
    return %arg0, %c0_i32, %c0_i32_0 : i32, i32, i32
  }
  func.func @transform_5(%arg0: i32, %arg1: i32) -> (i32, i32, i32) {
    %c0_i32 = arith.constant 0 : i32
    %c0_i32_0 = arith.constant 0 : i32
    %c0_i32_1 = arith.constant 0 : i32
    return %arg0, %c0_i32, %c0_i32_0 : i32, i32, i32
  }
}

</mosaic_0001>

<llo_original>
// kernel: tpu_custom_call.1
$region0: #{tpu_custom_call.1}
  #allocation0 [shape = 'u32[]', space=smem, size = 0x4, offset = 0x4, fixed_abs, tag = 'smem constant byte address 0x4 - core index']
  #allocation1 [shape = 'u32[144,128]{1,0:T(1,128)}', space=vmem, size = 0x12000, scoped, tag = 'internal scratch']
  %s0 = inlined_call_operand.hbm [shape: f32[16,768], index: 0, kind: input, shape index: {}]
  %s1 = inlined_call_operand.hbm [shape: f32[768,128], index: 1, kind: input, shape index: {}]
  %s2 = inlined_call_operand.vmem [shape: f32[1,128], index: 2, kind: input, shape index: {}]
  %s3 = inlined_call_operand.vmem [shape: s32[16,1], index: 3, kind: input, shape index: {}]
  %s4 = inlined_call_operand.vmem [shape: f32[2,1,1], index: 4, kind: output, shape index: {0}]
  %s5 = inlined_call_operand.vmem [shape: f32[2,1,1], index: 5, kind: output, shape index: {1}]
  %6 = xla_tuple %s4, %s5
  %s7 = sld [smem:[#allocation0]]
  $region69: #{tpu_custom_call.1} parent=0
    _
  %s9 = ssub.s32 1, %s7
  %s10 = scalar_select 0, %s9, %s7
  $region1: #{tpu_custom_call.1} parent=0
    #allocation2 [shape = 'u8[49152]{0}', space=vmem, size = 0xc000, scoped, tag = 'input window, operand 0']
    #allocation3 [shape = 's32[2]{0}', space=sflag, size = 0x8, scoped, tag = 'scoped memory for tpu_custom_call.1']
    #allocation4 [shape = 'u8[393216]{0}', space=vmem, size = 0x60000, scoped, tag = 'input window, operand 1, single buffered']
    #allocation5 [shape = 's32[1]{0}', space=sflag, size = 0x4, scoped, tag = 'scoped memory for tpu_custom_call.1']
    %11 = vsyncpa [#allocation3], 0
    %s12 = scalar_lea.sflag [#allocation3], 1
    %13 = vsyncpa %s12, 0
    %14 = vsyncpa [#allocation5], 0
    loop: start=0, step=1, limit=4
    $region2: #{tpu_custom_call.1} parent=1 // loop_pre_header
      _
    $region3: #{tpu_custom_call.1} parent=1 // loop_header
      %s16 = sphi 0, %s20
      %p17 = scmp.ge.s32.totalorder %s16, 4
      %s23 = sphi 0, %s35
      %s24 = sphi 0, %s31
      %s25 = sphi 0, %s23
      %s26 = sphi 0, %s24
      %s27 = sphi 0, %s25
      %s28 = sphi 0, %s26
      %s40 = sphi 0, %s42
      %s43 = sphi 0, %s40
      %s44 = sphi 0, %s43
      %s60 = sphi 0, %s44
      %s64 = sphi 0, %s64
      %s66 = sphi 0, %s64
      %s67 = sphi 0, %s66
      %s81 = sphi 0, %s67
      %s85 = sphi 0, %s85
      %s87 = sphi 0, %s85
      %s88 = sphi 0, %s87
      %s102 = sphi 0, %s88
      %s110 = sphi 0, %s112
      %s113 = sphi 0, %s110
      %s114 = sphi 0, %s113
      %s130 = sphi 0, %s114
      %s136 = sphi 0, %s138
      %s139 = sphi 0, %s136
      %s140 = sphi 0, %s139
      %s156 = sphi 0, %s140
      %s162 = sphi 0, %s164
      %s165 = sphi 0, %s162
      %s166 = sphi 0, %s165
      %s182 = sphi 0, %s166
    $region4: #{tpu_custom_call.1} parent=1 // loop_header_branch
      %19 = sbr.rel (%p17) target = $region8
    $region5: #{tpu_custom_call.1} parent=1 // loop_body
      %s21 = ssub.s32 %s16, 1
      %s22 = ssub.s32 %s16, 2
      %s29 = sadd.s32 1, %s24
      %p30 = scmp.ge.s32.totalorder %s29, 1
      %s31 = scalar_select %p30, 0, %s29
      %s32 = sadd.s32 1, %s23
      %s33 = scalar_select %p30, %s32, %s23
      %p34 = scmp.ge.s32.totalorder %s33, 2
      %s35 = scalar_select %p34, 0, %s33
      %s36 = sadd.s32 %s23, %s24
      %s37 = sadd.s32 %s35, %s31
      %s38 = ssub.s32 %s36, %s37
      %p39 = scmp.eq.s32.totalorder %s38, 0
      %s41 = sadd.s32 %s40, 1
      %s42 = scalar_select %p39, %s40, %s41
      %p45 = pneg %p39
      %p46 = scmp.eq.s32.totalorder %s16, 1
      %p47 = por %p45, %p46
      %p48 = scmp.ne.s32.totalorder %s40, %s43
      %p49 = scmp.eq.s32.totalorder %s16, 0
      %p50 = por %p48, %p49
      %p51 = scmp.ne.s32.totalorder %s40, %s43
      %p52 = scmp.eq.s32.totalorder %s21, 1
      %p53 = por %p51, %p52
      %p54 = scmp.ne.s32.totalorder %s43, %s44
      %p55 = scmp.eq.s32.totalorder %s21, 0
      %p56 = por %p54, %p55
      %p57 = scmp.ne.s32.totalorder %s43, %s44
      %p58 = scmp.eq.s32.totalorder %s22, 1
      %p59 = por %p57, %p58
      %p61 = scmp.ne.s32.totalorder %s44, %s60
      %p62 = scmp.eq.s32.totalorder %s22, 0
      %p63 = por %p61, %p62
      %s65 = sadd.s32 %s64, 1
      %p68 = scmp.eq.s32.totalorder %s16, 1
      %p69 = scmp.ne.s32.totalorder %s64, %s66
      %p70 = scmp.eq.s32.totalorder %s16, 0
      %p71 = por %p69, %p70
      %p72 = scmp.ne.s32.totalorder %s64, %s66
      %p73 = scmp.eq.s32.totalorder %s21, 1
      %p74 = por %p72, %p73
      %p75 = scmp.ne.s32.totalorder %s66, %s67
      %p76 = scmp.eq.s32.totalorder %s21, 0
      %p77 = por %p75, %p76
      %p78 = scmp.ne.s32.totalorder %s66, %s67
      %p79 = scmp.eq.s32.totalorder %s22, 1
      %p80 = por %p78, %p79
      %p82 = scmp.ne.s32.totalorder %s67, %s81
      %p83 = scmp.eq.s32.totalorder %s22, 0
      %p84 = por %p82, %p83
      %s86 = sadd.s32 %s85, 1
      %p89 = scmp.eq.s32.totalorder %s16, 1
      %p90 = scmp.ne.s32.totalorder %s85, %s87
      %p91 = scmp.eq.s32.totalorder %s16, 0
      %p92 = por %p90, %p91
      %p93 = scmp.ne.s32.totalorder %s85, %s87
      %p94 = scmp.eq.s32.totalorder %s21, 1
      %p95 = por %p93, %p94
      %p96 = scmp.ne.s32.totalorder %s87, %s88
      %p97 = scmp.eq.s32.totalorder %s21, 0
      %p98 = por %p96, %p97
      %p99 = scmp.ne.s32.totalorder %s87, %s88
      %p100 = scmp.eq.s32.totalorder %s22, 1
      %p101 = por %p99, %p100
      %p103 = scmp.ne.s32.totalorder %s88, %s102
      %p104 = scmp.eq.s32.totalorder %s22, 0
      %p105 = por %p103, %p104
      %s106 = sadd.s32 %s23, %s24
      %s107 = sadd.s32 %s35, %s31
      %s108 = ssub.s32 %s106, %s107
      %p109 = scmp.eq.s32.totalorder %s108, 0
      %s111 = sadd.s32 %s110, 1
      %s112 = scalar_select %p109, %s110, %s111
      %p115 = pneg %p109
      %p116 = scmp.eq.s32.totalorder %s16, 1
      %p117 = por %p115, %p116
      %p118 = scmp.ne.s32.totalorder %s110, %s113
      %p119 = scmp.eq.s32.totalorder %s16, 0
      %p120 = por %p118, %p119
      %p121 = scmp.ne.s32.totalorder %s110, %s113
      %p122 = scmp.eq.s32.totalorder %s21, 1
      %p123 = por %p121, %p122
      %p124 = scmp.ne.s32.totalorder %s113, %s114
      %p125 = scmp.eq.s32.totalorder %s21, 0
      %p126 = por %p124, %p125
      %p127 = scmp.ne.s32.totalorder %s113, %s114
      %p128 = scmp.eq.s32.totalorder %s22, 1
      %p129 = por %p127, %p128
      %p131 = scmp.ne.s32.totalorder %s114, %s130
      %p132 = scmp.eq.s32.totalorder %s22, 0
      %p133 = por %p131, %p132
      %s134 = ssub.s32 %s23, %s35
      %p135 = scmp.eq.s32.totalorder %s134, 0
      %s137 = sadd.s32 %s136, 1
      %s138 = scalar_select %p135, %s136, %s137
      %p141 = pneg %p135
      %p142 = scmp.eq.s32.totalorder %s16, 1
      %p143 = por %p141, %p142
      %p144 = scmp.ne.s32.totalorder %s136, %s139
      %p145 = scmp.eq.s32.totalorder %s16, 0
      %p146 = por %p144, %p145
      %p147 = scmp.ne.s32.totalorder %s136, %s139
      %p148 = scmp.eq.s32.totalorder %s21, 1
      %p149 = por %p147, %p148
      %p150 = scmp.ne.s32.totalorder %s139, %s140
      %p151 = scmp.eq.s32.totalorder %s21, 0
      %p152 = por %p150, %p151
      %p153 = scmp.ne.s32.totalorder %s139, %s140
      %p154 = scmp.eq.s32.totalorder %s22, 1
      %p155 = por %p153, %p154
      %p157 = scmp.ne.s32.totalorder %s140, %s156
      %p158 = scmp.eq.s32.totalorder %s22, 0
      %p159 = por %p157, %p158
      %s160 = ssub.s32 %s23, %s35
      %p161 = scmp.eq.s32.totalorder %s160, 0
      %s163 = sadd.s32 %s162, 1
      %s164 = scalar_select %p161, %s162, %s163
      %p167 = pneg %p161
      %p168 = scmp.eq.s32.totalorder %s16, 1
      %p169 = por %p167, %p168
      %p170 = scmp.ne.s32.totalorder %s162, %s165
      %p171 = scmp.eq.s32.totalorder %s16, 0
      %p172 = por %p170, %p171
      %p173 = scmp.ne.s32.totalorder %s162, %s165
      %p174 = scmp.eq.s32.totalorder %s21, 1
      %p175 = por %p173, %p174
      %p176 = scmp.ne.s32.totalorder %s165, %s166
      %p177 = scmp.eq.s32.totalorder %s21, 0
      %p178 = por %p176, %p177
      %p179 = scmp.ne.s32.totalorder %s165, %s166
      %p180 = scmp.eq.s32.totalorder %s22, 1
      %p181 = por %p179, %p180
      %p183 = scmp.ne.s32.totalorder %s166, %s182
      %p184 = scmp.eq.s32.totalorder %s22, 0
      %p185 = por %p183, %p184
      %p186 = scmp.le.s32.totalorder 1, %s16
      %p187 = scmp.lt.s32.totalorder %s16, 3
      %p188 = pnand %p186, %p187
      %p189 = pneg %p188
      // Predicated region
      $region9: #{tpu_custom_call.1} parent=5 // pred_check
        _
      $region10: #{tpu_custom_call.1} parent=5 // pred_check_branch
        %191 = sbr.rel (%p188) target = $region12
      $region11: #{tpu_custom_call.1} parent=5 // pred_region
        %s192 = ssub.s32 %s16, 1
        // Predicated region
        $region13: #{tpu_custom_call.1} parent=11 // pred_check
          %p193 = pneg %p77
        $region14: #{tpu_custom_call.1} parent=11 // pred_check_branch
          %195 = sbr.rel (%p193) target = $region16
        $region15: #{tpu_custom_call.1} parent=11 // pred_region
          %s197 = ssub.s32 12288, 12288
          %198 = vsyncadd [#allocation5], %s197
          %s199 = sshll.u32 [#allocation4], 4
          %s200 = int_to_ptr.vmem [resolvable:$true] %s199
          %205 = dma.hbm_to_vmem [thread:$0]  %s1, 12288, %s200, [#allocation5], 128, 128, 8
        $region16: #{tpu_custom_call.1} parent=11 // pred_fallthru
          _
        // Predicated region
        $region17: #{tpu_custom_call.1} parent=11 // pred_check
          %p206 = pneg %p98
        $region18: #{tpu_custom_call.1} parent=11 // pred_check_branch
          %208 = sbr.rel (%p206) target = $region20
        $region19: #{tpu_custom_call.1} parent=11 // pred_region
          _
        $region20: #{tpu_custom_call.1} parent=11 // pred_fallthru
          _
      $region12: #{tpu_custom_call.1} parent=5 // pred_fallthru
        _
      %p209 = scmp.lt.s32.totalorder %s16, 2
      // Predicated region
      $region21: #{tpu_custom_call.1} parent=5 // pred_check
        %p210 = pneg %p209
      $region22: #{tpu_custom_call.1} parent=5 // pred_check_branch
        %212 = sbr.rel (%p210) target = $region24
      $region23: #{tpu_custom_call.1} parent=5 // pred_region
        // Predicated region
        $region25: #{tpu_custom_call.1} parent=23 // pred_check
          %p213 = pneg %p50
        $region26: #{tpu_custom_call.1} parent=23 // pred_check_branch
          %215 = sbr.rel (%p213) target = $region28
        $region27: #{tpu_custom_call.1} parent=23 // pred_region
          %s216 = sand.u32 %s40, 1
          %s217 = scalar_lea.sflag [#allocation3], %s216
          %s218 = sand.u32 %s40, 1
          %s219 = smul.addr %s218, 48
          %s220 = scalar_lea.vmem [#allocation2], %s219
          %s221 = sadd.s32 %s23, %s24
          %s223 = ssub.s32 768, 768
          %224 = vsyncadd %s217, %s223
          %s225 = smul.addr %s221, 6
          %s226 = smul.addr %s225, 128
          %s227 = scalar_lea.hbm %s0, %s226
          %s229 = sshll.u32 %s220, 4
          %s230 = int_to_ptr.vmem [resolvable:$true] %s229
          %232 = dma.hbm_to_vmem [thread:$0]  %s227, 768, %s230, %s217
        $region28: #{tpu_custom_call.1} parent=23 // pred_fallthru
          _
        // Predicated region
        $region29: #{tpu_custom_call.1} parent=23 // pred_check
          %p233 = pneg %p120
        $region30: #{tpu_custom_call.1} parent=23 // pred_check_branch
          %235 = sbr.rel (%p233) target = $region32
        $region31: #{tpu_custom_call.1} parent=23 // pred_region
          %s236 = sadd.s32 %s23, %s24
          %p237 = scmp.lt.s32.totalorder %s236, 1
          %s238 = scalar_select %p237, %s236, 1
          %s239 = smul.addr %s238, 8
          %s240 = scalar_lea.vmem %s3, %s239
          %s241 = sadd.s32 %s23, %s24
        $region32: #{tpu_custom_call.1} parent=23 // pred_fallthru
          _
      $region24: #{tpu_custom_call.1} parent=5 // pred_fallthru
        _
      %p242 = scmp.le.s32.totalorder 1, %s16
      %p243 = scmp.lt.s32.totalorder %s16, 3
      %p244 = pnand %p242, %p243
      %p245 = pneg %p244
      // Predicated region
      $region33: #{tpu_custom_call.1} parent=5 // pred_check
        _
      $region34: #{tpu_custom_call.1} parent=5 // pred_check_branch
        %247 = sbr.rel (%p244) target = $region36
      $region35: #{tpu_custom_call.1} parent=5 // pred_region
        %s248 = ssub.s32 %s16, 1
        %s249 = sand.u32 %s43, 1
        %s250 = scalar_lea.sflag [#allocation3], %s249
        %s251 = sand.u32 %s43, 1
        %s252 = smul.addr %s251, 48
        %s253 = scalar_lea.vmem [#allocation2], %s252
        // Predicated region
        $region37: #{tpu_custom_call.1} parent=35 // pred_check
          %p254 = pneg %p56
        $region38: #{tpu_custom_call.1} parent=35 // pred_check_branch
          %256 = sbr.rel (%p254) target = $region40
        $region39: #{tpu_custom_call.1} parent=35 // pred_region
          %257 = dma.done %s250, 768
        $region40: #{tpu_custom_call.1} parent=35 // pred_fallthru
          _
        // Predicated region
        $region41: #{tpu_custom_call.1} parent=35 // pred_check
          %p258 = pneg %p77
        $region42: #{tpu_custom_call.1} parent=35 // pred_check_branch
          %260 = sbr.rel (%p258) target = $region44
        $region43: #{tpu_custom_call.1} parent=35 // pred_region
          %261 = dma.done [#allocation5], 12288
        $region44: #{tpu_custom_call.1} parent=35 // pred_fallthru
          _
        %s262 = sand.u32 %s43, 1
        %s263 = scalar_lea.sflag [#allocation3], %s262
        %s264 = sand.u32 %s43, 1
        %s265 = smul.addr %s264, 48
        %s266 = scalar_lea.vmem [#allocation2], %s265
        %p267 = pneg %p56
        %p268 = pneg %p53
        %p269 = pneg %p77
        %p270 = pneg %p74
        %p271 = pneg %p98
        %p272 = pneg %p95
        %s273 = sadd.s32 %s25, %s26
        %p274 = scmp.lt.s32.totalorder %s273, 1
        %s275 = scalar_select %p274, %s273, 1
        %s276 = smul.addr %s275, 8
        %s277 = scalar_lea.vmem %s3, %s276
        %p278 = pneg %p126
        %p279 = pneg %p123
        %p280 = pneg %p152
        %p281 = pneg %p149
        %p282 = scmp.lt.s32.totalorder %s25, 1
        %s283 = scalar_select %p282, %s25, 1
        %s284 = scalar_lea.vmem %s4, %s283
        %p285 = pneg %p178
        %p286 = pneg %p175
        %p287 = scmp.lt.s32.totalorder %s25, 1
        %s288 = scalar_select %p287, %s25, 1
        %s289 = scalar_lea.vmem %s5, %s288
        %s290 = sadd.s32 %s25, %s26
        %s291 = sadd.s32 %s25, %s26
        %p292 = scmp.lt.s32.totalorder %s291, 1
        %s293 = scalar_select %p292, %s291, 1
        %s294 = smul.addr %s293, 8
        %s295 = scalar_lea.vmem %s3, %s294
        %s296 = sadd.s32 %s25, %s26
        %p297 = scmp.lt.s32.totalorder %s25, 1
        %s298 = scalar_select %p297, %s25, 1
        %s299 = scalar_lea.vmem %s4, %s298
        %p300 = scmp.lt.s32.totalorder %s25, 1
        %s301 = scalar_select %p300, %s25, 1
        %s302 = scalar_lea.vmem %s5, %s301
        %p303 = scmp.eq.s32.totalorder %s26, 0
        // Predicated region
        $region45: #{tpu_custom_call.1} parent=35 // pred_check
          %p304 = pneg %p303
        $region46: #{tpu_custom_call.1} parent=35 // pred_check_branch
          %306 = sbr.rel (%p304) target = $region48
        $region47: #{tpu_custom_call.1} parent=35 // pred_region
          %vm307 = vcmask 0
          %308 = vst.msk [vmem:[%s299] sm:$0x1] %vm307, 0.0
          %309 = vst.msk [vmem:[%s302] sm:$0x1] %vm307, 0.0
        $region48: #{tpu_custom_call.1} parent=35 // pred_fallthru
          _
        %v310 = vld [vmem:[%s253] sm:$0xff]
        %v311 = vld [vmem:[%s253 + $0x8] sm:$0xff]
        %v312 = vld [vmem:[%s253 + $0x10] sm:$0xff]
        %v313 = vld [vmem:[%s253 + $0x18] sm:$0xff]
        %v314 = vld [vmem:[%s253 + $0x20] sm:$0xff]
        %v315 = vld [vmem:[%s253 + $0x28] sm:$0xff]
        %v316 = vld [vmem:[#allocation4] sm:$0xff]
        %v317 = vld [vmem:[#allocation4 + $0x8] sm:$0xff]
        %v318 = vld [vmem:[#allocation4 + $0x10] sm:$0xff]
        %v319 = vld [vmem:[#allocation4 + $0x18] sm:$0xff]
        %v320 = vld [vmem:[#allocation4 + $0x20] sm:$0xff]
        %v321 = vld [vmem:[#allocation4 + $0x28] sm:$0xff]
        %v322 = vld [vmem:[#allocation4 + $0x30] sm:$0xff]
        %v323 = vld [vmem:[#allocation4 + $0x38] sm:$0xff]
        %v324 = vld [vmem:[#allocation4 + $0x40] sm:$0xff]
        %v325 = vld [vmem:[#allocation4 + $0x48] sm:$0xff]
        %v326 = vld [vmem:[#allocation4 + $0x50] sm:$0xff]
        %v327 = vld [vmem:[#allocation4 + $0x58] sm:$0xff]
        %v328 = vld [vmem:[#allocation4 + $0x60] sm:$0xff]
        %v329 = vld [vmem:[#allocation4 + $0x68] sm:$0xff]
        %v330 = vld [vmem:[#allocation4 + $0x70] sm:$0xff]
        %v331 = vld [vmem:[#allocation4 + $0x78] sm:$0xff]
        %v332 = vld [vmem:[#allocation4 + $0x80] sm:$0xff]
        %v333 = vld [vmem:[#allocation4 + $0x88] sm:$0xff]
        %v334 = vld [vmem:[#allocation4 + $0x90] sm:$0xff]
        %v335 = vld [vmem:[#allocation4 + $0x98] sm:$0xff]
        %v336 = vld [vmem:[#allocation4 + $0xa0] sm:$0xff]
        %v337 = vld [vmem:[#allocation4 + $0xa8] sm:$0xff]
        %v338 = vld [vmem:[#allocation4 + $0xb0] sm:$0xff]
        %v339 = vld [vmem:[#allocation4 + $0xb8] sm:$0xff]
        %v340 = vld [vmem:[#allocation4 + $0xc0] sm:$0xff]
        %v341 = vld [vmem:[#allocation4 + $0xc8] sm:$0xff]
        %v342 = vld [vmem:[#allocation4 + $0xd0] sm:$0xff]
        %v343 = vld [vmem:[#allocation4 + $0xd8] sm:$0xff]
        %v344 = vld [vmem:[#allocation4 + $0xe0] sm:$0xff]
        %v345 = vld [vmem:[#allocation4 + $0xe8] sm:$0xff]
        %v346 = vld [vmem:[#allocation4 + $0xf0] sm:$0xff]
        %v347 = vld [vmem:[#allocation4 + $0xf8] sm:$0xff]
        %v348 = vld [vmem:[#allocation4 + $0x100] sm:$0xff]
        %v349 = vld [vmem:[#allocation4 + $0x108] sm:$0xff]
        %v350 = vld [vmem:[#allocation4 + $0x110] sm:$0xff]
        %v351 = vld [vmem:[#allocation4 + $0x118] sm:$0xff]
        %v352 = vld [vmem:[#allocation4 + $0x120] sm:$0xff]
        %v353 = vld [vmem:[#allocation4 + $0x128] sm:$0xff]
        %v354 = vld [vmem:[#allocation4 + $0x130] sm:$0xff]
        %v355 = vld [vmem:[#allocation4 + $0x138] sm:$0xff]
        %v356 = vld [vmem:[#allocation4 + $0x140] sm:$0xff]
        %v357 = vld [vmem:[#allocation4 + $0x148] sm:$0xff]
        %v358 = vld [vmem:[#allocation4 + $0x150] sm:$0xff]
        %v359 = vld [vmem:[#allocation4 + $0x158] sm:$0xff]
        %v360 = vld [vmem:[#allocation4 + $0x160] sm:$0xff]
        %v361 = vld [vmem:[#allocation4 + $0x168] sm:$0xff]
        %v362 = vld [vmem:[#allocation4 + $0x170] sm:$0xff]
        %v363 = vld [vmem:[#allocation4 + $0x178] sm:$0xff]
        %v364 = vld [vmem:[#allocation4 + $0x180] sm:$0xff]
        %v365 = vld [vmem:[#allocation4 + $0x188] sm:$0xff]
        %v366 = vld [vmem:[#allocation4 + $0x190] sm:$0xff]
        %v367 = vld [vmem:[#allocation4 + $0x198] sm:$0xff]
        %v368 = vld [vmem:[#allocation4 + $0x1a0] sm:$0xff]
        %v369 = vld [vmem:[#allocation4 + $0x1a8] sm:$0xff]
        %v370 = vld [vmem:[#allocation4 + $0x1b0] sm:$0xff]
        %v371 = vld [vmem:[#allocation4 + $0x1b8] sm:$0xff]
        %v372 = vld [vmem:[#allocation4 + $0x1c0] sm:$0xff]
        %v373 = vld [vmem:[#allocation4 + $0x1c8] sm:$0xff]
        %v374 = vld [vmem:[#allocation4 + $0x1d0] sm:$0xff]
        %v375 = vld [vmem:[#allocation4 + $0x1d8] sm:$0xff]
        %v376 = vld [vmem:[#allocation4 + $0x1e0] sm:$0xff]
        %v377 = vld [vmem:[#allocation4 + $0x1e8] sm:$0xff]
        %v378 = vld [vmem:[#allocation4 + $0x1f0] sm:$0xff]
        %v379 = vld [vmem:[#allocation4 + $0x1f8] sm:$0xff]
        %v380 = vld [vmem:[#allocation4 + $0x200] sm:$0xff]
        %v381 = vld [vmem:[#allocation4 + $0x208] sm:$0xff]
        %v382 = vld [vmem:[#allocation4 + $0x210] sm:$0xff]
        %v383 = vld [vmem:[#allocation4 + $0x218] sm:$0xff]
        %v384 = vld [vmem:[#allocation4 + $0x220] sm:$0xff]
        %v385 = vld [vmem:[#allocation4 + $0x228] sm:$0xff]
        %v386 = vld [vmem:[#allocation4 + $0x230] sm:$0xff]
        %v387 = vld [vmem:[#allocation4 + $0x238] sm:$0xff]
        %v388 = vld [vmem:[#allocation4 + $0x240] sm:$0xff]
        %v389 = vld [vmem:[#allocation4 + $0x248] sm:$0xff]
        %v390 = vld [vmem:[#allocation4 + $0x250] sm:$0xff]
        %v391 = vld [vmem:[#allocation4 + $0x258] sm:$0xff]
        %v392 = vld [vmem:[#allocation4 + $0x260] sm:$0xff]
        %v393 = vld [vmem:[#allocation4 + $0x268] sm:$0xff]
        %v394 = vld [vmem:[#allocation4 + $0x270] sm:$0xff]
        %v395 = vld [vmem:[#allocation4 + $0x278] sm:$0xff]
        %v396 = vld [vmem:[#allocation4 + $0x280] sm:$0xff]
        %v397 = vld [vmem:[#allocation4 + $0x288] sm:$0xff]
        %v398 = vld [vmem:[#allocation4 + $0x290] sm:$0xff]
        %v399 = vld [vmem:[#allocation4 + $0x298] sm:$0xff]
        %v400 = vld [vmem:[#allocation4 + $0x2a0] sm:$0xff]
        %v401 = vld [vmem:[#allocation4 + $0x2a8] sm:$0xff]
        %v402 = vld [vmem:[#allocation4 + $0x2b0] sm:$0xff]
        %v403 = vld [vmem:[#allocation4 + $0x2b8] sm:$0xff]
        %v404 = vld [vmem:[#allocation4 + $0x2c0] sm:$0xff]
        %v405 = vld [vmem:[#allocation4 + $0x2c8] sm:$0xff]
        %v406 = vld [vmem:[#allocation4 + $0x2d0] sm:$0xff]
        %v407 = vld [vmem:[#allocation4 + $0x2d8] sm:$0xff]
        %v408 = vld [vmem:[#allocation4 + $0x2e0] sm:$0xff]
        %v409 = vld [vmem:[#allocation4 + $0x2e8] sm:$0xff]
        %v410 = vld [vmem:[#allocation4 + $0x2f0] sm:$0xff]
        %v411 = vld [vmem:[#allocation4 + $0x2f8] sm:$0xff]
        %v412 = vld [vmem:[%s2] sm:$0x1]
        %v414 = vlaneseq
        %v415 = vshrl.u32 %v414, 7
        %v416 = vsub.s32 0, %v415
        %v417 = vrot.slane %v412, %v416
        %419 = vmatprep.subr.mxu0 0.0
        %420 = vmatpush1.msra.mxu0 %v316
        %421 = vmatprep.subr.mxu0 0.0
        %422 = vmatpush1.msra.mxu0 %v317
        %423 = vmatprep.subr.mxu0 0.0
        %424 = vmatpush1.msra.mxu0 %v318
        %425 = vmatprep.subr.mxu0 0.0
        %426 = vmatpush1.msra.mxu0 %v319
        %427 = vmatprep.subr.mxu0 0.0
        %428 = vmatpush1.msra.mxu0 %v320
        %429 = vmatprep.subr.mxu0 0.0
        %430 = vmatpush1.msra.mxu0 %v321
        %431 = vmatprep.subr.mxu0 0.0
        %432 = vmatpush1.msra.mxu0 %v322
        %433 = vmatprep.subr.mxu0 0.0
        %434 = vmatpush1.msra.mxu0 %v323
        %435 = vmatprep.subr.mxu0 0.0
        %436 = vmatpush1.msra.mxu0 %v324
        %437 = vmatprep.subr.mxu0 0.0
        %438 = vmatpush1.msra.mxu0 %v325
        %439 = vmatprep.subr.mxu0 0.0
        %440 = vmatpush1.msra.mxu0 %v326
        %441 = vmatprep.subr.mxu0 0.0
        %442 = vmatpush1.msra.mxu0 %v327
        %443 = vmatprep.subr.mxu0 0.0
        %444 = vmatpush1.msra.mxu0 %v328
        %445 = vmatprep.subr.mxu0 0.0
        %446 = vmatpush1.msra.mxu0 %v329
        %447 = vmatprep.subr.mxu0 0.0
        %448 = vmatpush1.msra.mxu0 %v330
        %449 = vmatprep.subr.mxu0 0.0
        %450 = vmatpush1.msra.mxu0 %v331
        %451 = vmatprep.subr.mxu0 0.0
        %452 = vmatpush1.msra.mxu0 %v332
        %453 = vmatprep.subr.mxu0 0.0
        %454 = vmatpush1.msra.mxu0 %v333
        %455 = vmatprep.subr.mxu0 0.0
        %456 = vmatpush1.msra.mxu0 %v334
        %457 = vmatprep.subr.mxu0 0.0
        %458 = vmatpush1.msra.mxu0 %v335
        %459 = vmatprep.subr.mxu0 0.0
        %460 = vmatpush1.msra.mxu0 %v336
        %461 = vmatprep.subr.mxu0 0.0
        %462 = vmatpush1.msra.mxu0 %v337
        %463 = vmatprep.subr.mxu0 0.0
        %464 = vmatpush1.msra.mxu0 %v338
        %465 = vmatprep.subr.mxu0 0.0
        %466 = vmatpush1.msra.mxu0 %v339
        %467 = vmatprep.subr.mxu0 0.0
        %468 = vmatpush1.msra.mxu0 %v340
        %469 = vmatprep.subr.mxu0 0.0
        %470 = vmatpush1.msra.mxu0 %v341
        %471 = vmatprep.subr.mxu0 0.0
        %472 = vmatpush1.msra.mxu0 %v342
        %473 = vmatprep.subr.mxu0 0.0
        %474 = vmatpush1.msra.mxu0 %v343
        %475 = vmatprep.subr.mxu0 0.0
        %476 = vmatpush1.msra.mxu0 %v344
        %477 = vmatprep.subr.mxu0 0.0
        %478 = vmatpush1.msra.mxu0 %v345
        %479 = vmatprep.subr.mxu0 0.0
        %480 = vmatpush1.msra.mxu0 %v346
        %481 = vmatprep.subr.mxu0 0.0
        %482 = vmatpush1.msra.mxu0 %v347
        %483 = vmatprep.mubr.f32.mxu0 %v311
        %484 = vmatmul.mubr.f32.gmra.mrb[0].mxu0 %v310
        %v485 = vpop.f32.mrb[0].mxu0
        %v486 = vadd.f32 %v417, %v485
        %v487 = vpop.f32.mrb[0].mxu0
        %488 = vdwg.mxu0
        %489 = vmatprep.subr.mxu0 0.0
        %490 = vmatpush1.msra.mxu0 %v348
        %491 = vmatprep.subr.mxu0 0.0
        %492 = vmatpush1.msra.mxu0 %v349
        %493 = vmatprep.subr.mxu0 0.0
        %494 = vmatpush1.msra.mxu0 %v350
        %495 = vmatprep.subr.mxu0 0.0
        %496 = vmatpush1.msra.mxu0 %v351
        %497 = vmatprep.subr.mxu0 0.0
        %498 = vmatpush1.msra.mxu0 %v352
        %499 = vmatprep.subr.mxu0 0.0
        %500 = vmatpush1.msra.mxu0 %v353
        %501 = vmatprep.subr.mxu0 0.0
        %502 = vmatpush1.msra.mxu0 %v354
        %503 = vmatprep.subr.mxu0 0.0
        %504 = vmatpush1.msra.mxu0 %v355
        %505 = vmatprep.subr.mxu0 0.0
        %506 = vmatpush1.msra.mxu0 %v356
        %507 = vmatprep.subr.mxu0 0.0
        %508 = vmatpush1.msra.mxu0 %v357
        %509 = vmatprep.subr.mxu0 0.0
        %510 = vmatpush1.msra.mxu0 %v358
        %511 = vmatprep.subr.mxu0 0.0
        %512 = vmatpush1.msra.mxu0 %v359
        %513 = vmatprep.subr.mxu0 0.0
        %514 = vmatpush1.msra.mxu0 %v360
        %515 = vmatprep.subr.mxu0 0.0
        %516 = vmatpush1.msra.mxu0 %v361
        %517 = vmatprep.subr.mxu0 0.0
        %518 = vmatpush1.msra.mxu0 %v362
        %519 = vmatprep.subr.mxu0 0.0
        %520 = vmatpush1.msra.mxu0 %v363
        %521 = vmatprep.subr.mxu0 0.0
        %522 = vmatpush1.msra.mxu0 %v364
        %523 = vmatprep.subr.mxu0 0.0
        %524 = vmatpush1.msra.mxu0 %v365
        %525 = vmatprep.subr.mxu0 0.0
        %526 = vmatpush1.msra.mxu0 %v366
        %527 = vmatprep.subr.mxu0 0.0
        %528 = vmatpush1.msra.mxu0 %v367
        %529 = vmatprep.subr.mxu0 0.0
        %530 = vmatpush1.msra.mxu0 %v368
        %531 = vmatprep.subr.mxu0 0.0
        %532 = vmatpush1.msra.mxu0 %v369
        %533 = vmatprep.subr.mxu0 0.0
        %534 = vmatpush1.msra.mxu0 %v370
        %535 = vmatprep.subr.mxu0 0.0
        %536 = vmatpush1.msra.mxu0 %v371
        %537 = vmatprep.subr.mxu0 0.0
        %538 = vmatpush1.msra.mxu0 %v372
        %539 = vmatprep.subr.mxu0 0.0
        %540 = vmatpush1.msra.mxu0 %v373
        %541 = vmatprep.subr.mxu0 0.0
        %542 = vmatpush1.msra.mxu0 %v374
        %543 = vmatprep.subr.mxu0 0.0
        %544 = vmatpush1.msra.mxu0 %v375
        %545 = vmatprep.subr.mxu0 0.0
        %546 = vmatpush1.msra.mxu0 %v376
        %547 = vmatprep.subr.mxu0 0.0
        %548 = vmatpush1.msra.mxu0 %v377
        %549 = vmatprep.subr.mxu0 0.0
        %550 = vmatpush1.msra.mxu0 %v378
        %551 = vmatprep.subr.mxu0 0.0
        %552 = vmatpush1.msra.mxu0 %v379
        %553 = vmatprep.mubr.f32.mxu0 %v313
        %554 = vmatmul.mubr.f32.gmra.mrb[0].mxu0 %v312
        %v555 = vpop.f32.mrb[0].mxu0
        %v556 = vadd.f32 %v486, %v555
        %v557 = vpop.f32.mrb[0].mxu0
        %558 = vdwg.mxu0
        %559 = vmatprep.subr.mxu0 0.0
        %560 = vmatpush1.msra.mxu0 %v380
        %561 = vmatprep.subr.mxu0 0.0
        %562 = vmatpush1.msra.mxu0 %v381
        %563 = vmatprep.subr.mxu0 0.0
        %564 = vmatpush1.msra.mxu0 %v382
        %565 = vmatprep.subr.mxu0 0.0
        %566 = vmatpush1.msra.mxu0 %v383
        %567 = vmatprep.subr.mxu0 0.0
        %568 = vmatpush1.msra.mxu0 %v384
        %569 = vmatprep.subr.mxu0 0.0
        %570 = vmatpush1.msra.mxu0 %v385
        %571 = vmatprep.subr.mxu0 0.0
        %572 = vmatpush1.msra.mxu0 %v386
        %573 = vmatprep.subr.mxu0 0.0
        %574 = vmatpush1.msra.mxu0 %v387
        %575 = vmatprep.subr.mxu0 0.0
        %576 = vmatpush1.msra.mxu0 %v388
        %577 = vmatprep.subr.mxu0 0.0
        %578 = vmatpush1.msra.mxu0 %v389
        %579 = vmatprep.subr.mxu0 0.0
        %580 = vmatpush1.msra.mxu0 %v390
        %581 = vmatprep.subr.mxu0 0.0
        %582 = vmatpush1.msra.mxu0 %v391
        %583 = vmatprep.subr.mxu0 0.0
        %584 = vmatpush1.msra.mxu0 %v392
        %585 = vmatprep.subr.mxu0 0.0
        %586 = vmatpush1.msra.mxu0 %v393
        %587 = vmatprep.subr.mxu0 0.0
        %588 = vmatpush1.msra.mxu0 %v394
        %589 = vmatprep.subr.mxu0 0.0
        %590 = vmatpush1.msra.mxu0 %v395
        %591 = vmatprep.subr.mxu0 0.0
        %592 = vmatpush1.msra.mxu0 %v396
        %593 = vmatprep.subr.mxu0 0.0
        %594 = vmatpush1.msra.mxu0 %v397
        %595 = vmatprep.subr.mxu0 0.0
        %596 = vmatpush1.msra.mxu0 %v398
        %597 = vmatprep.subr.mxu0 0.0
        %598 = vmatpush1.msra.mxu0 %v399
        %599 = vmatprep.subr.mxu0 0.0
        %600 = vmatpush1.msra.mxu0 %v400
        %601 = vmatprep.subr.mxu0 0.0
        %602 = vmatpush1.msra.mxu0 %v401
        %603 = vmatprep.subr.mxu0 0.0
        %604 = vmatpush1.msra.mxu0 %v402
        %605 = vmatprep.subr.mxu0 0.0
        %606 = vmatpush1.msra.mxu0 %v403
        %607 = vmatprep.subr.mxu0 0.0
        %608 = vmatpush1.msra.mxu0 %v404
        %609 = vmatprep.subr.mxu0 0.0
        %610 = vmatpush1.msra.mxu0 %v405
        %611 = vmatprep.subr.mxu0 0.0
        %612 = vmatpush1.msra.mxu0 %v406
        %613 = vmatprep.subr.mxu0 0.0
        %614 = vmatpush1.msra.mxu0 %v407
        %615 = vmatprep.subr.mxu0 0.0
        %616 = vmatpush1.msra.mxu0 %v408
        %617 = vmatprep.subr.mxu0 0.0
        %618 = vmatpush1.msra.mxu0 %v409
        %619 = vmatprep.subr.mxu0 0.0
        %620 = vmatpush1.msra.mxu0 %v410
        %621 = vmatprep.subr.mxu0 0.0
        %622 = vmatpush1.msra.mxu0 %v411
        %623 = vmatprep.mubr.f32.mxu0 %v315
        %624 = vmatmul.mubr.f32.gmra.mrb[0].mxu0 %v314
        %v625 = vpop.f32.mrb[0].mxu0
        %v626 = vadd.f32 %v556, %v625
        %v627 = vpop.f32.mrb[0].mxu0
        %628 = vdwg.mxu0
        %v629 = vlaneseq
        %v630 = vand.u32 %v629, 127
        %vm631 = vcmp.lt.s32.totalorder %v630, 5
        %v632 = vsel %vm631, %v626, -1e+30
        %633 = vmax.xlane.f32.xlu0 %v632
        %v634 = vpop.xlane.xlu0 %633
        %v635 = vsub.f32 %v632, %v634
        %v636 = vmul.f32 %v635, 1.442695
        %v637 = vpow.pop %v636
        %638 = vadd.xlane.f32.xlu0 %v637
        %v639 = vpop.xlane.xlu0 %638
        %v640 = vlog2.pop %v639
        %v641 = vmul.f32 %v640, 0.6931472
        %v642 = vadd.f32 %v634, %v641
        %v643 = vld [vmem:[%s295] sm:$0xff]
        %644 = vset.pattern.permute.xlu0 0
        %645 = vperm.xlu0 %644, %v643
        %v646 = vpop.permute.xlu0 %645
        %vm647 = vcmp.eq.s32.totalorder %v630, %v646
        %v648 = vsel %vm647, %v626, 0.0
        %649 = vadd.xlane.f32.xlu0 %v648
        %v650 = vpop.xlane.xlu0 %649
        %vm651 = vcmp.ge.s32.totalorder %v643, 0
        %vm652 = vcmp.lt.s32.totalorder %v643, 5
        %vm653 = vmand %vm651, %vm652
        %v654 = vsub.f32 %v642, %v650
        %v655 = vsel %vm653, %v654, 0.0
        %v656 = vld [vmem:[%s299] sm:$0x1]
        %vm657 = vcmask 7168
        %v658 = vsel %vm657, %v655, 0.0
        %659 = vadd.xlane.f32.xlu0 %v658
        %v660 = vpop.xlane.xlu0 %659
        %v661 = vrot.slane %v660, 4
        %v662 = vadd.f32 %v660, %v661
        %v663 = vrot.slane %v662, 2
        %v664 = vadd.f32 %v662, %v663
        %v665 = vrot.slane %v664, 1
        %v666 = vadd.f32 %v664, %v665
        %s667 = vtos %v666
        %v668 = vstv %s667
        %v669 = vadd.f32 %v656, %v668
        %vm670 = vcmask 0
        %671 = vst.msk [vmem:[%s299] sm:$0x1] %vm670, %v669
        %v672 = vld [vmem:[%s302] sm:$0x1]
        %v673 = vsel %vm653, 1, 0
        %v674 = vcvt.s32.f32 %v673
        %v675 = vsel %vm657, %v674, 0.0
        %676 = vadd.xlane.f32.xlu0 %v675
        %v677 = vpop.xlane.xlu0 %676
        %v678 = vrot.slane %v677, 4
        %v679 = vadd.f32 %v677, %v678
        %v680 = vrot.slane %v679, 2
        %v681 = vadd.f32 %v679, %v680
        %v682 = vrot.slane %v681, 1
        %v683 = vadd.f32 %v681, %v682
        %s684 = vtos %v683
        %v685 = vstv %s684
        %v686 = vadd.f32 %v672, %v685
        %687 = vst.msk [vmem:[%s302] sm:$0x1] %vm670, %v686
        %p688 = scmp.lt.s32.totalorder %s25, 1
        %s689 = scalar_select %p688, %s25, 1
        %s690 = scalar_lea.vmem %s4, %s689
        %p691 = scmp.lt.s32.totalorder %s25, 1
        %s692 = scalar_select %p691, %s25, 1
        %s693 = scalar_lea.vmem %s5, %s692
        // Predicated region
        $region49: #{tpu_custom_call.1} parent=35 // pred_check
          %p694 = pneg %p149
        $region50: #{tpu_custom_call.1} parent=35 // pred_check_branch
          %696 = sbr.rel (%p694) target = $region52
        $region51: #{tpu_custom_call.1} parent=35 // pred_region
          _
        $region52: #{tpu_custom_call.1} parent=35 // pred_fallthru
          _
        // Predicated region
        $region53: #{tpu_custom_call.1} parent=35 // pred_check
          %p697 = pneg %p175
        $region54: #{tpu_custom_call.1} parent=35 // pred_check_branch
          %699 = sbr.rel (%p697) target = $region56
        $region55: #{tpu_custom_call.1} parent=35 // pred_region
          _
        $region56: #{tpu_custom_call.1} parent=35 // pred_fallthru
          _
      $region36: #{tpu_custom_call.1} parent=5 // pred_fallthru
        _
      %p700 = scmp.le.s32.totalorder 2, %s16
      // Predicated region
      $region57: #{tpu_custom_call.1} parent=5 // pred_check
        %p701 = pneg %p700
      $region58: #{tpu_custom_call.1} parent=5 // pred_check_branch
        %703 = sbr.rel (%p701) target = $region60
      $region59: #{tpu_custom_call.1} parent=5 // pred_region
        %s704 = ssub.s32 %s16, 2
        // Predicated region
        $region61: #{tpu_custom_call.1} parent=59 // pred_check
          %p705 = pneg %p155
        $region62: #{tpu_custom_call.1} parent=59 // pred_check_branch
          %707 = sbr.rel (%p705) target = $region64
        $region63: #{tpu_custom_call.1} parent=59 // pred_region
          %p708 = scmp.lt.s32.totalorder %s27, 1
          %s709 = scalar_select %p708, %s27, 1
          %s710 = scalar_lea.vmem %s4, %s709
        $region64: #{tpu_custom_call.1} parent=59 // pred_fallthru
          _
        // Predicated region
        $region65: #{tpu_custom_call.1} parent=59 // pred_check
          %p711 = pneg %p181
        $region66: #{tpu_custom_call.1} parent=59 // pred_check_branch
          %713 = sbr.rel (%p711) target = $region68
        $region67: #{tpu_custom_call.1} parent=59 // pred_region
          %p714 = scmp.lt.s32.totalorder %s27, 1
          %s715 = scalar_select %p714, %s27, 1
          %s716 = scalar_lea.vmem %s5, %s715
        $region68: #{tpu_custom_call.1} parent=59 // pred_fallthru
          _
      $region60: #{tpu_custom_call.1} parent=5 // pred_fallthru
        _
    $region6: #{tpu_custom_call.1} parent=1 // loop_footer
      %s20 = sadd.s32 1, %s16
    $region7: #{tpu_custom_call.1} parent=1 // loop_footer_branch
      %15 = sbr.rel target = $region3
    $region8: #{tpu_custom_call.1} parent=1 // loop_exit
      _
    %717 = vsyncpa [#allocation3], 1
    %s718 = scalar_lea.sflag [#allocation3], 1
    %719 = vsyncpa %s718, 1
    %720 = vsyncpa [#allocation5], 1

</llo_original>
